<compile_context>
chip_gen: v7x
topology: tpu7x:2x2x1
jax: 0.10.0
libtpu: 0.0.40
codegen_flags: <defaults>
</compile_context>

<pallas_src>
import jax
import jax.numpy as jnp
from jax.experimental import pallas as pl
from jax.experimental.pallas import tpu as pltpu


def _round_up(x, m):
    return ((x + m - 1) // m) * m


def _pick_tile(extent, unit, max_tile):
    """Largest multiple of `unit` that divides `extent` and is <= max_tile."""
    best = unit
    t = unit
    while t <= min(extent, max_tile):
        if extent % t == 0:
            best = t
        t += unit
    return best


def _tiled_vmem_limit_bytes():
    """Generation-aware scoped-VMEM limit: ~48 MiB on v7x (64 MiB physical),
    up to ~96 MiB on v5e/v6e (128 MiB physical)."""
    try:
        cap = int(pltpu.get_tpu_info().vmem_capacity_bytes)
    except Exception:
        cap = 64 * 1024 * 1024  # conservative fallback (v7x per-TC)
    return min((cap * 3) // 4, 100 * 1024 * 1024)


# ---------------------------------------------------------------------------
# Small path: no grid, whole operands resident in VMEM (full-array blocks, so
# no (8,128) padding of the activation is required).
# ---------------------------------------------------------------------------
def _head_linear_small_kernel(h_ref, w_ref, b_ref, o_ref):
    acc = jnp.dot(h_ref[...], w_ref[...], preferred_element_type=jnp.float32)
    o_ref[...] = (acc + b_ref[...].astype(jnp.float32)).astype(o_ref.dtype)


def _head_linear_small(h, weight, bias2d, out_dim):
    B, C = h.shape
    _, Lp = weight.shape
    cost = pl.CostEstimate(
        flops=2 * B * C * Lp,
        transcendentals=0,
        bytes_accessed=4 * (B * C + C * Lp + Lp + B * Lp),
    )
    out = pl.pallas_call(
        _head_linear_small_kernel,
        out_shape=jax.ShapeDtypeStruct((B, Lp), jnp.float32),
        in_specs=[
            pl.BlockSpec(memory_space=pltpu.MemorySpace.VMEM),
            pl.BlockSpec(memory_space=pltpu.MemorySpace.VMEM),
            pl.BlockSpec(memory_space=pltpu.MemorySpace.VMEM),
        ],
        out_specs=pl.BlockSpec(memory_space=pltpu.MemorySpace.VMEM),
        compiler_params=pltpu.CompilerParams(
            # Explicit limit: stays clear of v5e's 16 MiB default scoped VMEM.
            vmem_limit_bytes=32 * 1024 * 1024,
        ),
        cost_estimate=cost,
    )(h, weight, bias2d)
    return out if out_dim == Lp else out[:, :out_dim]


# ---------------------------------------------------------------------------
# Tiled path: (M, N, K) grid, f32 output accumulated directly in o_ref,
# bias folded into the k==0 init (no scratch, no epilogue copy).
# ---------------------------------------------------------------------------
def _head_linear_tiled_kernel(h_ref, w_ref, b_ref, o_ref):
    k = pl.program_id(2)

    @pl.when(k == 0)
    def _():
        # Initialize the (VMEM-resident) output block with the broadcast bias.
        o_ref[...] = jnp.broadcast_to(
            b_ref[...].astype(jnp.float32), o_ref.shape)

    o_ref[...] += jnp.dot(h_ref[...], w_ref[...],
                          preferred_element_type=jnp.float32)


def _head_linear_tiled(h, weight, bias2d, out_dim):
    B, C = h.shape
    Cw, Lp = weight.shape
    assert Cw == C, "weight rows must match h features (pad h before calling)"
    assert Lp % 128 == 0 and bias2d.shape == (1, Lp)

    # --- M: pad batch to a sublane multiple; prefer a single M block so the
    #        big weight operand is streamed from HBM exactly once. ---
    Bp = _round_up(B, 8)
    if Bp <= 512:
        tm, gm = Bp, 1
    else:
        Bp = _round_up(B, 256)
        tm, gm = 256, Bp // 256
    if Bp != B:
        h = jnp.pad(h, ((0, Bp - B), (0, 0)))

    gemv_like = tm <= 32  # realistic Head batch sizes: weight-streaming bound

    # --- K: tile only when 128-aligned; otherwise use a full-K block (legal:
    #        block dim equals the array dim) so the weight is never re-padded. ---
    max_tk = 1024 if gemv_like else 512
    tk = _pick_tile(C, 128, max_tk) if C % 128 == 0 else C
    gk = C // tk

    # --- N: lane-dense tiles; bigger weight tiles in the GEMV-like regime. ---
    max_tn = 512 if gemv_like else 256
    tn = _pick_tile(Lp, 128, max_tn)
    # v7x shards "parallel" grid axes across its 2 TensorCores: when the M axis
    # collapses, make sure N has >= 2 blocks (cheap no-op cost on 1-TC chips).
    if gm == 1 and Lp // tn < 2 and Lp >= 256:
        tn = _pick_tile(Lp, 128, Lp // 2)
    gn = Lp // tn

    cost = pl.CostEstimate(
        flops=2 * Bp * C * Lp,
        transcendentals=0,
        bytes_accessed=4 * (gn * Bp * C + C * Lp + Lp + Bp * Lp),
    )
    out = pl.pallas_call(
        _head_linear_tiled_kernel,
        out_shape=jax.ShapeDtypeStruct((Bp, Lp), jnp.float32),
        grid=(gm, gn, gk),
        in_specs=[
            pl.BlockSpec((tm, tk), lambda i, j, k: (i, k)),
            pl.BlockSpec((tk, tn), lambda i, j, k: (k, j)),
            pl.BlockSpec((1, tn), lambda i, j, k: (0, j)),
        ],
        out_specs=pl.BlockSpec((tm, tn), lambda i, j, k: (i, j)),
        compiler_params=pltpu.CompilerParams(
            dimension_semantics=("parallel", "parallel", "arbitrary"),
            vmem_limit_bytes=_tiled_vmem_limit_bytes(),
        ),
        cost_estimate=cost,
    )(h, weight, bias2d)
    return out[:B, :out_dim]


def head_linear(h, weight, bias, out_dim=None):
    """out = h @ weight + bias  (nn.Linear semantics, weight stored [C, L]).

    `weight`/`bias` may already be lane-padded (HeadPallas pre-pads at init so
    no padding happens on the hot path); `out_dim` is the logical output width.
    """
    B, C = h.shape
    Cw, L = weight.shape
    if out_dim is None:
        out_dim = L

    # Lane-pad L / normalize bias only if the caller did not (no-op for the class).
    Lp = _round_up(L, 128)
    if Lp != L:
        weight = jnp.pad(weight, ((0, 0), (0, Lp - L)))
    b2 = bias.reshape(1, -1)
    if b2.shape[1] != Lp:
        b2 = jnp.pad(b2, ((0, 0), (0, Lp - b2.shape[1])))
    if Cw != C:
        # Caller K-padded the weight with zero rows; pad h (cheap, few rows).
        h = jnp.pad(h, ((0, 0), (0, Cw - C)))
        C = Cw

    # Dispatch: whole-operand footprint small enough -> single no-grid call.
    vmem_bytes = 4 * (B * C + C * Lp + Lp + B * Lp)
    if vmem_bytes <= 6 * 1024 * 1024:
        return _head_linear_small(h, weight, b2, out_dim)
    return _head_linear_tiled(h, weight, b2, out_dim)


class HeadPallas:
    """Synthetic-parameter equivalent of the PyTorch Head module."""

    def __init__(self, ctrl_dim, location_size, gamma, key):
        self.gamma = gamma  # TODO(synk): gamma unused in forward (as in the spec)
        self.ctrl_dim = ctrl_dim
        self.location_size = location_size
        Lp = _round_up(location_size, 128)
        self._Lp = Lp

        k1, k2, k3, k4 = jax.random.split(key, 4)
        bound = 1.0 / (ctrl_dim ** 0.5)
        # Weights stored pre-transposed: [ctrl_dim, location_size].
        self.read_w = jax.random.uniform(
            k1, (ctrl_dim, location_size), jnp.float32, -bound, bound)
        self.read_b = jax.random.uniform(
            k2, (location_size,), jnp.float32, -bound, bound)
        self.write_w = jax.random.uniform(
            k3, (ctrl_dim, location_size), jnp.float32, -bound, bound)
        self.write_b = jax.random.uniform(
            k4, (location_size,), jnp.float32, -bound, bound)

        # Pre-pad ONCE at init (lane-dense L) so forward never pads parameters.
        padL = Lp - location_size
        self.read_w_p = jnp.pad(self.read_w, ((0, 0), (0, padL)))
        self.read_b_p = jnp.pad(self.read_b, (0, padL)).reshape(1, Lp)
        self.write_w_p = jnp.pad(self.write_w, ((0, 0), (0, padL)))
        self.write_b_p = jnp.pad(self.write_b, (0, padL)).reshape(1, Lp)

        # Fused [read | write]: each head padded to Lp first so the split
        # boundary is lane-aligned and the post-call slices are cheap views.
        self.both_w_p = jnp.concatenate([self.read_w_p, self.write_w_p], axis=1)
        self.both_b_p = jnp.concatenate([self.read_b_p, self.write_b_p], axis=1)

    def forward(self, h):
        return head_linear(h, self.read_w_p, self.read_b_p,
                           out_dim=self.location_size)

    def compute_write_key(self, h):
        return head_linear(h, self.write_w_p, self.write_b_p,
                           out_dim=self.location_size)

    def forward_both(self, h):
        both = head_linear(h, self.both_w_p, self.both_b_p)  # (B, 2*Lp)
        L, Lp = self.location_size, self._Lp
        return both[:, :L], both[:, Lp:Lp + L]


if __name__ == "__main__":
    key = jax.random.PRNGKey(0)
    k_param, k_in, k_h2, k_w2, k_b2 = jax.random.split(key, 5)

    batch = 2
    ctrl_dim = 32
    location_size = 16
    gamma = 0.95

    head = HeadPallas(ctrl_dim, location_size, gamma, k_param)
    h = jax.random.normal(k_in, (batch, ctrl_dim), jnp.float32)

    # forward (read_net)
    read_key = head.forward(h)
    jax.block_until_ready(read_key)
    ref_r = h @ head.read_w + head.read_b
    assert read_key.shape == (batch, location_size)
    assert jnp.allclose(read_key, ref_r, atol=1e-5, rtol=1e-5)

    # compute_write_key (write_net)
    write_key = head.compute_write_key(h)
    jax.block_until_ready(write_key)
    ref_w = h @ head.write_w + head.write_b
    assert jnp.allclose(write_key, ref_w, atol=1e-5, rtol=1e-5)

    # fused read+write in one pallas_call
    rk2, wk2 = head.forward_both(h)
    jax.block_until_ready(wk2)
    assert jnp.allclose(rk2, ref_r, atol=1e-5, rtol=1e-5)
    assert jnp.allclose(wk2, ref_w, atol=1e-5, rtol=1e-5)

    # Exercise the tiled path directly (multi-block N grid, K reduction,
    # non-aligned B/L, single-M-block weight streaming).
    Bb, Cb, Lb = 300, 1024, 260
    hb = jax.random.normal(k_h2, (Bb, Cb), jnp.float32)
    wb = jax.random.normal(k_w2, (Cb, Lb), jnp.float32) * 0.02
    bb = jax.random.normal(k_b2, (Lb,), jnp.float32)
    Lbp = _round_up(Lb, 128)
    wb_p = jnp.pad(wb, ((0, 0), (0, Lbp - Lb)))
    bb_p = jnp.pad(bb, (0, Lbp - Lb)).reshape(1, Lbp)
    out_b = _head_linear_tiled(hb, wb_p, bb_p, Lb)
    jax.block_until_ready(out_b)
    ref_b = hb @ wb + bb
    assert out_b.shape == (Bb, Lb)
    assert jnp.allclose(out_b, ref_b, atol=5e-2, rtol=1e-2)

    print("KERNEL_OK")
</pallas_src>

<mosaic_0001>
module attributes {stable_mosaic.version = 11 : i64} {
  func.func @_head_linear_small_kernel(%arg0: memref<2x32xf32, #tpu.memory_space<vmem>>, %arg1: memref<32x128xf32, #tpu.memory_space<vmem>>, %arg2: memref<1x128xf32, #tpu.memory_space<vmem>>, %arg3: memref<2x128xf32, #tpu.memory_space<vmem>>) attributes {dimension_semantics = [], scalar_prefetch = 0 : i64, scratch_operands = 0 : i64, tpu.core_type = #tpu.core_type<tc>} {
    %c0 = arith.constant 0 : index
    %c0_0 = arith.constant 0 : index
    %0 = vector.load %arg0[%c0, %c0_0] : memref<2x32xf32, #tpu.memory_space<vmem>>, vector<2x32xf32>
    %c0_1 = arith.constant 0 : index
    %c0_2 = arith.constant 0 : index
    %1 = vector.load %arg1[%c0_1, %c0_2] : memref<32x128xf32, #tpu.memory_space<vmem>>, vector<32x128xf32>
    %cst = arith.constant dense<0.000000e+00> : vector<2x128xf32>
    %2 = tpu.matmul %0, %1, %cst {dimension_numbers = #tpu.dot_dimension_numbers<[1], [0], [0], [1], [0, 0, 1, 1], [], []>} : vector<2x32xf32>, vector<32x128xf32>, vector<2x128xf32> -> vector<2x128xf32>
    %c0_3 = arith.constant 0 : index
    %c0_4 = arith.constant 0 : index
    %3 = vector.load %arg2[%c0_3, %c0_4] : memref<1x128xf32, #tpu.memory_space<vmem>>, vector<1x128xf32>
    %4 = vector.broadcast %3 : vector<1x128xf32> to vector<2x128xf32>
    %5 = arith.addf %2, %4 : vector<2x128xf32>
    %c0_5 = arith.constant 0 : index
    %c0_6 = arith.constant 0 : index
    %6 = vector.load %arg3[%c0_5, %c0_6] : memref<2x128xf32, #tpu.memory_space<vmem>>, vector<2x128xf32>
    tpu.vector_store %arg3[%c0_5, %c0_6], %5 {strides = array<i32>} : memref<2x128xf32, #tpu.memory_space<vmem>>, vector<2x128xf32>,
    return
  }
}

</mosaic_0001>

<llo_original>
// kernel: tpu_custom_call.1
$region0: #{tpu_custom_call.1}
  #allocation0 [shape = 'u32[]', space=smem, size = 0x4, offset = 0x4, fixed_abs, tag = 'smem constant byte address 0x4 - core index']
  #allocation1 [shape = 'u32[144,128]{1,0:T(1,128)}', space=vmem, size = 0x12000, scoped, tag = 'internal scratch']
  %s0 = inlined_call_operand.hbm [shape: f32[2,32], index: 0, kind: input, shape index: {}]
  %s1 = inlined_call_operand.hbm [shape: f32[32,128], index: 1, kind: input, shape index: {}]
  %s2 = inlined_call_operand.vmem [shape: f32[1,128], index: 2, kind: input, shape index: {}]
  %s3 = inlined_call_operand.hbm [shape: f32[2,128], index: 3, kind: output, shape index: {}]
  %s4 = sld [smem:[#allocation0]]
  $region30: #{tpu_custom_call.1} parent=0
    _
  %s6 = ssub.s32 1, %s4
  %s7 = scalar_select 0, %s6, %s4
  $region1: #{tpu_custom_call.1} parent=0
    #allocation2 [shape = 'u8[1024]{0}', space=vmem, size = 0x400, scoped, tag = 'input window, operand 0, single buffered']
    #allocation3 [shape = 's32[1]{0}', space=sflag, size = 0x4, scoped, tag = 'scoped memory for tpu_custom_call.1']
    #allocation4 [shape = 's32[1]{0}', space=sflag, size = 0x4, scoped, tag = 'scoped memory for tpu_custom_call.1']
    #allocation5 [shape = 'u8[16384]{0}', space=vmem, size = 0x4000, scoped, tag = 'input window, operand 1, single buffered']
    #allocation6 [shape = 's32[1]{0}', space=sflag, size = 0x4, scoped, tag = 'scoped memory for tpu_custom_call.1']
    #allocation7 [shape = 'u8[1024]{0}', space=vmem, size = 0x400, scoped, tag = 'output window, operand 0, single buffered']
    %8 = vsyncpa [#allocation3], 0
    %9 = vsyncpa [#allocation6], 0
    %10 = vsyncpa [#allocation4], 0
    // Predicated region
    $region2: #{tpu_custom_call.1} parent=1 // pred_check
      _
    $region3: #{tpu_custom_call.1} parent=1 // pred_check_branch
      %12 = sbr.rel (0) target = $region5
    $region4: #{tpu_custom_call.1} parent=1 // pred_region
      %s14 = ssub.s32 32, 32
      %15 = vsyncadd [#allocation3], %s14
      %s17 = sshll.u32 [#allocation2], 4
      %s18 = int_to_ptr.vmem [resolvable:$true] %s17
      %20 = dma.hbm_to_vmem [thread:$0]  %s0, 32, %s18, [#allocation3]
    $region5: #{tpu_custom_call.1} parent=1 // pred_fallthru
      _
    // Predicated region
    $region6: #{tpu_custom_call.1} parent=1 // pred_check
      _
    $region7: #{tpu_custom_call.1} parent=1 // pred_check_branch
      %22 = sbr.rel (0) target = $region9
    $region8: #{tpu_custom_call.1} parent=1 // pred_region
      %s24 = ssub.s32 512, 512
      %25 = vsyncadd [#allocation6], %s24
      %s26 = sshll.u32 [#allocation5], 4
      %s27 = int_to_ptr.vmem [resolvable:$true] %s26
      %32 = dma.hbm_to_vmem [thread:$0]  %s1, 512, %s27, [#allocation6], 128, 128, 8
    $region9: #{tpu_custom_call.1} parent=1 // pred_fallthru
      _
    // Predicated region
    $region10: #{tpu_custom_call.1} parent=1 // pred_check
      _
    $region11: #{tpu_custom_call.1} parent=1 // pred_check_branch
      %34 = sbr.rel (0) target = $region13
    $region12: #{tpu_custom_call.1} parent=1 // pred_region
      _
    $region13: #{tpu_custom_call.1} parent=1 // pred_fallthru
      _
    // Predicated region
    $region14: #{tpu_custom_call.1} parent=1 // pred_check
      _
    $region15: #{tpu_custom_call.1} parent=1 // pred_check_branch
      %36 = sbr.rel (0) target = $region17
    $region16: #{tpu_custom_call.1} parent=1 // pred_region
      %37 = dma.done [#allocation3], 32
    $region17: #{tpu_custom_call.1} parent=1 // pred_fallthru
      _
    // Predicated region
    $region18: #{tpu_custom_call.1} parent=1 // pred_check
      _
    $region19: #{tpu_custom_call.1} parent=1 // pred_check_branch
      %39 = sbr.rel (0) target = $region21
    $region20: #{tpu_custom_call.1} parent=1 // pred_region
      %40 = dma.done [#allocation6], 512
    $region21: #{tpu_custom_call.1} parent=1 // pred_fallthru
      _
    %v41 = vld [vmem:[#allocation2] sm:$0x3]
    %v42 = vld [vmem:[#allocation5] sm:$0xff]
    %v43 = vld [vmem:[#allocation5 + $0x8] sm:$0xff]
    %v44 = vld [vmem:[#allocation5 + $0x10] sm:$0xff]
    %v45 = vld [vmem:[#allocation5 + $0x18] sm:$0xff]
    %v46 = vld [vmem:[%s2] sm:$0x1]
    %v48 = vlaneseq
    %v49 = vshrl.u32 %v48, 7
    %v50 = vsub.s32 0, %v49
    %v51 = vrot.slane %v46, %v50
    %vm53 = vcmask 261120
    %v55 = vsel %vm53, %v41, 0
    %57 = vmatprep.subr.mxu0 0.0
    %58 = vmatpush1.msra.mxu0 %v42
    %59 = vmatprep.subr.mxu0 0.0
    %60 = vmatpush1.msra.mxu0 %v43
    %61 = vmatprep.subr.mxu0 0.0
    %62 = vmatpush1.msra.mxu0 %v44
    %63 = vmatprep.subr.mxu0 0.0
    %64 = vmatpush1.msra.mxu0 %v45
    %65 = vmatprep.subr.mxu0 0.0
    %66 = vmatpush1.msra.mxu0 0.0
    %67 = vmatprep.subr.mxu0 0.0
    %68 = vmatpush1.msra.mxu0 0.0
    %69 = vmatprep.subr.mxu0 0.0
    %70 = vmatpush1.msra.mxu0 0.0
    %71 = vmatprep.subr.mxu0 0.0
    %72 = vmatpush1.msra.mxu0 0.0
    %73 = vmatprep.subr.mxu0 0.0
    %74 = vmatpush1.msra.mxu0 0.0
    %75 = vmatprep.subr.mxu0 0.0
    %76 = vmatpush1.msra.mxu0 0.0
    %77 = vmatprep.subr.mxu0 0.0
    %78 = vmatpush1.msra.mxu0 0.0
    %79 = vmatprep.subr.mxu0 0.0
    %80 = vmatpush1.msra.mxu0 0.0
    %81 = vmatprep.subr.mxu0 0.0
    %82 = vmatpush1.msra.mxu0 0.0
    %83 = vmatprep.subr.mxu0 0.0
    %84 = vmatpush1.msra.mxu0 0.0
    %85 = vmatprep.subr.mxu0 0.0
    %86 = vmatpush1.msra.mxu0 0.0
    %87 = vmatprep.subr.mxu0 0.0
    %88 = vmatpush1.msra.mxu0 0.0
    %89 = vmatprep.subr.mxu0 0.0
    %90 = vmatpush1.msra.mxu0 0.0
    %91 = vmatprep.subr.mxu0 0.0
    %92 = vmatpush1.msra.mxu0 0.0
    %93 = vmatprep.subr.mxu0 0.0
    %94 = vmatpush1.msra.mxu0 0.0
    %95 = vmatprep.subr.mxu0 0.0
    %96 = vmatpush1.msra.mxu0 0.0
    %97 = vmatprep.subr.mxu0 0.0
    %98 = vmatpush1.msra.mxu0 0.0
    %99 = vmatprep.subr.mxu0 0.0
    %100 = vmatpush1.msra.mxu0 0.0
    %101 = vmatprep.subr.mxu0 0.0
    %102 = vmatpush1.msra.mxu0 0.0
    %103 = vmatprep.subr.mxu0 0.0
    %104 = vmatpush1.msra.mxu0 0.0
    %105 = vmatprep.subr.mxu0 0.0
    %106 = vmatpush1.msra.mxu0 0.0
    %107 = vmatprep.subr.mxu0 0.0
    %108 = vmatpush1.msra.mxu0 0.0
    %109 = vmatprep.subr.mxu0 0.0
    %110 = vmatpush1.msra.mxu0 0.0
    %111 = vmatprep.subr.mxu0 0.0
    %112 = vmatpush1.msra.mxu0 0.0
    %113 = vmatprep.subr.mxu0 0.0
    %114 = vmatpush1.msra.mxu0 0.0
    %115 = vmatprep.subr.mxu0 0.0
    %116 = vmatpush1.msra.mxu0 0.0
    %117 = vmatprep.subr.mxu0 0.0
    %118 = vmatpush1.msra.mxu0 0.0
    %119 = vmatprep.subr.mxu0 0.0
    %120 = vmatpush1.msra.mxu0 0.0
    %121 = vmatprep.mubr.f32.mxu0 0.0
    %122 = vmatmul.mubr.f32.gmra.mrb[0].mxu0 %v55
    %v123 = vpop.f32.mrb[0].mxu0
    %v124 = vadd.f32 %v51, %v123
    %v125 = vpop.f32.mrb[0].mxu0
    %126 = vdwg.mxu0
    %127 = vst [vmem:[#allocation7] sm:$0x3] %v124
    // Predicated region
    $region22: #{tpu_custom_call.1} parent=1 // pred_check
      _
    $region23: #{tpu_custom_call.1} parent=1 // pred_check_branch
      %129 = sbr.rel (0) target = $region25
    $region24: #{tpu_custom_call.1} parent=1 // pred_region
      %s131 = ssub.s32 32, 32
      %132 = vsyncadd [#allocation4], %s131
      %s134 = sshll.u32 [#allocation7], 4
      %s135 = int_to_ptr.vmem [resolvable:$true] %s134
      %137 = dma.vmem_to_hbm [thread:$0]  %s135, 32, %s3, [#allocation4]
    $region25: #{tpu_custom_call.1} parent=1 // pred_fallthru
      _
    // Predicated region
    $region26: #{tpu_custom_call.1} parent=1 // pred_check
      _
    $region27: #{tpu_custom_call.1} parent=1 // pred_check_branch
      %139 = sbr.rel (0) target = $region29
    $region28: #{tpu_custom_call.1} parent=1 // pred_region
      %140 = dma.done [#allocation4], 32
    $region29: #{tpu_custom_call.1} parent=1 // pred_fallthru
      _
    %141 = vsyncpa [#allocation3], 1
    %142 = vsyncpa [#allocation6], 1
    %143 = vsyncpa [#allocation4], 1

</llo_original>
